<compile_context>
chip_gen: v7x
topology: tpu7x:2x2x1
jax: 0.10.0
libtpu: 0.0.40
codegen_flags: <defaults>
</compile_context>

<pallas_src>
import functools
import math

import jax
import jax.numpy as jnp
from jax.experimental import pallas as pl
from jax.experimental.pallas import tpu as pltpu

NEG_SLOPE = 0.1     # LeakyReLU negative_slope
NEG_INF = -1e30     # finite sentinel: keeps exp(m_prev - m_new) NaN-free for empty rows


def _round_up(x, m):
    return ((x + m - 1) // m) * m


# ---------------- kernel 1: node projection with fused a_l / a_r reduction ----------------

def node_proj_kernel(x_ref, wcat_ref, h_ref, hlr_ref, *, hf):
    # prod = x @ [W | W@ALR]  (bf16 MXU inputs, f32 accumulation)
    prod = jnp.dot(x_ref[...], wcat_ref[...], preferred_element_type=jnp.float32)
    # NaN clean (matches h[isnan(h)] = 0).
    # TODO(synk): hlr is cleaned on the fused product, not recomputed from cleaned h; this
    #             differs from the reference only if NaNs actually appear in x @ W.
    prod = jnp.where(jnp.isnan(prod), 0.0, prod)
    h_ref[...] = prod[:, :hf].astype(h_ref.dtype)     # bf16 h stream
    hlr_ref[...] = prod[:, hf:]                        # f32 [hl | hr] per-node scores


# ---- kernel 3: src-tiled online edge-softmax + transposed multi-head SpMM (dst-tiled out) ----

def attn_spmm_kernel(he_ref, hr_ref, hl_ref, et_ref, h_ref,
                     out_ref, md_ref,
                     acc_ref, m_ref, l_ref, *, nhead, F, num_etypes):
    src_step = pl.program_id(1)
    n_src = pl.num_programs(1)

    @pl.when(src_step == 0)
    def _init():
        m_ref[...] = jnp.full_like(m_ref, NEG_INF)
        l_ref[...] = jnp.zeros_like(l_ref)
        acc_ref[...] = jnp.zeros_like(acc_ref)

    # --- head-invariant work, once per (dst, src) tile ---
    em = et_ref[...].astype(jnp.int32)          # int8 HBM stream, widened once per tile
    edge = em > 0                               # (TS, T) incidence mask
    etype_w = [(em == (t + 1)).astype(jnp.float32) for t in range(num_etypes)]

    # --- per-head online softmax + transposed SpMM (static unrolled head loop) ---
    for hd in range(nhead):
        # scores, transposed layout: sc[src, dst] = hl[src] + hr[dst] + he[etype]
        sc = hl_ref[:, hd:hd + 1] + hr_ref[hd:hd + 1, :]           # (TS, T)
        for t in range(num_etypes):
            sc = sc + etype_w[t] * he_ref[t, hd]                   # scalar from SMEM table
        sc = jnp.where(sc >= 0, sc, NEG_SLOPE * sc)                # LeakyReLU
        sc = jnp.where(edge, sc, NEG_INF)                          # softmax over incoming edges

        m_prev = m_ref[hd:hd + 1, :]                               # (1, T)
        m_new = jnp.maximum(m_prev, jnp.max(sc, axis=0, keepdims=True))
        alpha = jnp.exp(m_prev - m_new)                            # (1, T) rescale factor
        p = jnp.where(edge, jnp.exp(sc - m_new), 0.0)              # (TS, T), f32 exp (v5e-safe)
        l_ref[hd:hd + 1, :] = alpha * l_ref[hd:hd + 1, :] + jnp.sum(p, axis=0, keepdims=True)
        # transposed SpMM: rhs width is T (full 256 lanes), not F=32
        acc_ref[hd] = alpha * acc_ref[hd] + jnp.dot(
            h_ref[hd], p.astype(jnp.bfloat16), preferred_element_type=jnp.float32)  # (F, T)
        m_ref[hd:hd + 1, :] = m_new

    @pl.when(src_step == n_src - 1)
    def _finalize():
        outs = []
        for hd in range(nhead):
            inv = pl.reciprocal(jnp.maximum(l_ref[hd:hd + 1, :], 1e-30), approx=True)
            outs.append(jnp.transpose(acc_ref[hd] * inv))          # (T, F), XLU transpose
        out_ref[...] = jnp.concatenate(outs, axis=1)               # single lane-dense (T, nhead*F)
        md_ref[...] = jnp.transpose(
            jnp.concatenate([m_ref[...], l_ref[...]], axis=0))     # (T, 2*nhead) in one store


# ---------------- wrapper ----------------

def my_gat_conv_forward(x, edge_index, edge_type, params, *, nhead, out_features, edge_feats):
    """Forward pass of myGATConv (eval: dropouts identity, residual=False, activation=None)."""
    # TODO(synk): attn_drop (Dropout(0.5)) / feat_drop are treated as identity (eval mode).
    N, in_features = x.shape
    F = out_features
    HF = nhead * F
    W, W_e, edge_emb, a_l, a_r, a_e = (params[k] for k in ("W", "W_e", "edge_emb", "a_l", "a_r", "a_e"))
    num_etypes = edge_emb.shape[0]
    assert num_etypes < 127, "etype+1 must fit int8"

    # dst/src tile sizes; single full tile for small graphs, 256x256 otherwise.
    TILE = 256
    if N <= TILE:
        N_pad = max(_round_up(N, 128), 128)
        T = TS = N_pad
    else:
        T = TS = TILE
        N_pad = _round_up(N, TILE)

    # Fused reduction matrix folded into the weight tile: x @ [W | W@ALR] = [h | hl | hr].
    eye_h = jnp.eye(nhead, dtype=jnp.float32)
    AL = (a_l[0][:, :, None] * eye_h[:, None, :]).reshape(HF, nhead)
    AR = (a_r[0][:, :, None] * eye_h[:, None, :]).reshape(HF, nhead)
    ALR = jnp.concatenate([AL, AR], axis=1)                          # (HF, 2*nhead)
    W_cat = jnp.concatenate([W, W @ ALR], axis=1).astype(jnp.bfloat16)   # (in, HF + 2*nhead)

    x_pad = jnp.pad(x, ((0, N_pad - N), (0, 0))).astype(jnp.bfloat16)    # bf16 x stream

    # --- kernel 1: row-tiled projection (bf16 in, bf16 h out, f32 hl/hr out) ---
    kernel1 = functools.partial(node_proj_kernel, hf=HF)
    h, hlr = pl.pallas_call(
        kernel1,
        grid=(N_pad // T,),
        in_specs=[pl.BlockSpec((T, in_features), lambda i: (i, 0)),
                  pl.BlockSpec((in_features, HF + 2 * nhead), lambda i: (0, 0))],
        out_specs=(pl.BlockSpec((T, HF), lambda i: (i, 0)),
                   pl.BlockSpec((T, 2 * nhead), lambda i: (i, 0))),
        out_shape=(jax.ShapeDtypeStruct((N_pad, HF), jnp.bfloat16),
                   jax.ShapeDtypeStruct((N_pad, 2 * nhead), jnp.float32)),
        compiler_params=pltpu.CompilerParams(dimension_semantics=("parallel",)),
    )(x_pad, W_cat)

    hl = hlr[:, :nhead]        # (N_pad, nhead)  source-side scores  (a_l*h).sum(-1)
    hr = hlr[:, nhead:]        # (N_pad, nhead)  destination-side scores
    hr_t = hr.T                # (nhead, N_pad)

    # --- edge-type projection: tiny (num_etypes rows) -> plain JAX, no kernel launch ---
    e = jnp.dot(edge_emb, W_e).reshape(num_etypes, nhead, edge_feats)
    he = jnp.sum(a_e * e, axis=-1)                                   # (num_etypes, nhead)

    # --- glue: compact int8 (src, dst) edge-type map; no dense scores/attention in HBM ---
    # TODO(synk): duplicate (src, dst) pairs (multigraph) collapse to the last edge in this map.
    row, col = edge_index[0], edge_index[1]                          # row = src, col = dst
    et_T = jnp.zeros((N_pad, N_pad), jnp.int8).at[row, col].set(
        (edge_type.astype(jnp.int32) + 1).astype(jnp.int8))

    # head/feature-major bf16 h for the transposed SpMM: h_fm[hd] = h[:, hd, :]^T  (F, N_pad)
    h_fm = h.reshape(N_pad, nhead, F).transpose(1, 2, 0)

    # --- kernel 3: dst-parallel / src-reduction online softmax + transposed SpMM ---
    kernel3 = functools.partial(attn_spmm_kernel, nhead=nhead, F=F, num_etypes=num_etypes)
    out_pad, md = pl.pallas_call(
        kernel3,
        grid=(N_pad // T, N_pad // TS),                              # (dst, src) — src innermost
        in_specs=[pl.BlockSpec(memory_space=pltpu.MemorySpace.SMEM),  # he table (tiny)
                  pl.BlockSpec((nhead, T), lambda i, s: (0, i)),      # hr^T  (dst scores)
                  pl.BlockSpec((TS, nhead), lambda i, s: (s, 0)),     # hl    (src scores)
                  pl.BlockSpec((TS, T), lambda i, s: (s, i)),         # int8 edge-type tile
                  pl.BlockSpec((nhead, F, TS), lambda i, s: (0, 0, s))],  # bf16 h (feat-major)
        out_specs=(pl.BlockSpec((T, HF), lambda i, s: (i, 0)),        # lane-dense output block
                   pl.BlockSpec((T, 2 * nhead), lambda i, s: (i, 0))),  # merged [smax | den]
        out_shape=(jax.ShapeDtypeStruct((N_pad, HF), jnp.float32),
                   jax.ShapeDtypeStruct((N_pad, 2 * nhead), jnp.float32)),
        scratch_shapes=[pltpu.VMEM((nhead, F, T), jnp.float32),       # per-head (F, T) accumulators
                        pltpu.VMEM((nhead, T), jnp.float32),          # running max
                        pltpu.VMEM((nhead, T), jnp.float32)],         # running denom
        compiler_params=pltpu.CompilerParams(
            dimension_semantics=("parallel", "arbitrary")),
    )(he, hr_t, hl, et_T, h_fm)

    out = out_pad[:N]
    smax, den = md[:, :nhead], md[:, nhead:]

    # --- per-edge attention (E, nhead) from per-dst smax/denom: no dense writeback ---
    s_e = hl[row] + hr[col] + he[edge_type]
    s_e = jnp.where(s_e >= 0, s_e, NEG_SLOPE * s_e)
    edge_attention = jnp.exp(s_e - smax[col]) / jnp.maximum(den[col], 1e-30)
    return out, edge_attention


# ---------------- deterministic parameter init (matches reset_parameters) ----------------

def init_params(key, *, edge_feats, num_etypes, in_features, out_features, nhead):
    def reset(key, shape):
        stdv = math.sqrt(6.0 / (shape[-2] + shape[-1]))
        return jax.random.uniform(key, shape, jnp.float32, minval=-stdv, maxval=stdv)

    ks = jax.random.split(key, 6)
    return {
        "a_l": reset(ks[0], (1, nhead, out_features)),
        "a_r": reset(ks[1], (1, nhead, out_features)),
        "a_e": reset(ks[2], (1, nhead, edge_feats)),
        "W": reset(ks[3], (in_features, out_features * nhead)),
        "W_e": reset(ks[4], (edge_feats, edge_feats * nhead)),
        "edge_emb": reset(ks[5], (num_etypes, edge_feats)),
    }


if __name__ == "__main__":
    # small, module-consistent shapes
    N = 16            # nodes
    in_features = 32
    out_features = 32
    nhead = 4
    edge_feats = 8
    num_etypes = 3

    key = jax.random.PRNGKey(0)
    k_x, k_p = jax.random.split(key)
    x = jax.random.normal(k_x, (N, in_features), jnp.float32)

    # synthetic graph: self loops + ring (unique (src, dst) pairs)
    src = jnp.concatenate([jnp.arange(N), jnp.arange(N)]).astype(jnp.int32)
    dst = jnp.concatenate([jnp.arange(N), (jnp.arange(N) + 1) % N]).astype(jnp.int32)
    edge_index = jnp.stack([src, dst], axis=0)                 # (2, E), E = 32
    edge_type = (jnp.arange(edge_index.shape[1]) % num_etypes).astype(jnp.int32)

    params = init_params(k_p, edge_feats=edge_feats, num_etypes=num_etypes,
                         in_features=in_features, out_features=out_features, nhead=nhead)

    out, edge_attn = my_gat_conv_forward(
        x, edge_index, edge_type, params,
        nhead=nhead, out_features=out_features, edge_feats=edge_feats)
    jax.block_until_ready((out, edge_attn))

    assert out.shape == (N, nhead * out_features)
    assert edge_attn.shape == (edge_index.shape[1], nhead)
    assert bool(jnp.all(jnp.isfinite(out))) and bool(jnp.all(jnp.isfinite(edge_attn)))
    # softmax sanity: attention over incoming edges of each destination sums to ~1
    den_check = jnp.zeros((N, nhead), jnp.float32).at[edge_index[1]].add(edge_attn)
    assert bool(jnp.all(jnp.abs(den_check - 1.0) < 1e-2))
    print("KERNEL_OK")
</pallas_src>

<mosaic_0001>
module attributes {stable_mosaic.version = 11 : i64} {
  func.func @node_proj_kernel(%arg0: i32, %arg1: memref<128x32xbf16, #tpu.memory_space<vmem>>, %arg2: memref<32x136xbf16, #tpu.memory_space<vmem>>, %arg3: memref<128x128xbf16, #tpu.memory_space<vmem>>, %arg4: memref<128x8xf32, #tpu.memory_space<vmem>>) attributes {dimension_semantics = [#tpu.dimension_semantics<parallel>], iteration_bounds = array<i64: 1>, scalar_prefetch = 0 : i64, scratch_operands = 0 : i64, tpu.core_type = #tpu.core_type<tc>, window_params = [{transform_indices = @transform_0, window_bounds = array<i64: 128, 32>}, {pipeline_mode = #tpu.pipeline_mode<synchronous>, transform_indices = @transform_1, window_bounds = array<i64: 32, 136>}, {transform_indices = @transform_2, window_bounds = array<i64: 128, 128>}, {transform_indices = @transform_3, window_bounds = array<i64: 128, 8>}]} {
    %c0 = arith.constant 0 : index
    %c0_0 = arith.constant 0 : index
    %0 = vector.load %arg1[%c0, %c0_0] : memref<128x32xbf16, #tpu.memory_space<vmem>>, vector<128x32xbf16>
    %c0_1 = arith.constant 0 : index
    %c0_2 = arith.constant 0 : index
    %1 = vector.load %arg2[%c0_1, %c0_2] : memref<32x136xbf16, #tpu.memory_space<vmem>>, vector<32x136xbf16>
    %cst = arith.constant dense<0.000000e+00> : vector<128x136xf32>
    %2 = tpu.matmul %0, %1, %cst {dimension_numbers = #tpu.dot_dimension_numbers<[1], [0], [0], [1], [0, 0, 1, 1], [], []>} : vector<128x32xbf16>, vector<32x136xbf16>, vector<128x136xf32> -> vector<128x136xf32>
    %3 = arith.cmpf one, %2, %2 : vector<128x136xf32>
    %cst_3 = arith.constant 0.000000e+00 : f32
    %4 = vector.broadcast %cst_3 : f32 to vector<128x136xf32>
    %5 = arith.select %3, %4, %2 : vector<128x136xi1>, vector<128x136xf32>
    %6 = vector.extract_strided_slice %5 {offsets = [0, 0], sizes = [128, 128], strides = [1, 1]} : vector<128x136xf32> to vector<128x128xf32>
    %7 = arith.truncf %6 : vector<128x128xf32> to vector<128x128xbf16>
    %c0_4 = arith.constant 0 : index
    %c0_5 = arith.constant 0 : index
    %8 = vector.load %arg3[%c0_4, %c0_5] : memref<128x128xbf16, #tpu.memory_space<vmem>>, vector<128x128xbf16>
    tpu.vector_store %arg3[%c0_4, %c0_5], %7 {strides = array<i32>} : memref<128x128xbf16, #tpu.memory_space<vmem>>, vector<128x128xbf16>,
    %9 = vector.extract_strided_slice %5 {offsets = [0, 128], sizes = [128, 8], strides = [1, 1]} : vector<128x136xf32> to vector<128x8xf32>
    %c0_6 = arith.constant 0 : index
    %c0_7 = arith.constant 0 : index
    %10 = vector.load %arg4[%c0_6, %c0_7] : memref<128x8xf32, #tpu.memory_space<vmem>>, vector<128x8xf32>
    tpu.vector_store %arg4[%c0_6, %c0_7], %9 {strides = array<i32>} : memref<128x8xf32, #tpu.memory_space<vmem>>, vector<128x8xf32>,
    return
  }
  func.func @transform_0(%arg0: i32) -> (i32, i32) {
    %c0_i32 = arith.constant 0 : i32
    %c0_i32_0 = arith.constant 0 : i32
    return %arg0, %c0_i32 : i32, i32
  }
  func.func @transform_1(%arg0: i32) -> (i32, i32) {
    %c0_i32 = arith.constant 0 : i32
    %c0_i32_0 = arith.constant 0 : i32
    %c0_i32_1 = arith.constant 0 : i32
    return %c0_i32, %c0_i32_0 : i32, i32
  }
  func.func @transform_2(%arg0: i32) -> (i32, i32) {
    %c0_i32 = arith.constant 0 : i32
    %c0_i32_0 = arith.constant 0 : i32
    return %arg0, %c0_i32 : i32, i32
  }
  func.func @transform_3(%arg0: i32) -> (i32, i32) {
    %c0_i32 = arith.constant 0 : i32
    %c0_i32_0 = arith.constant 0 : i32
    return %arg0, %c0_i32 : i32, i32
  }
}

</mosaic_0001>

<llo_original>
// kernel: tpu_custom_call.1
$region0: #{tpu_custom_call.1}
  #allocation0 [shape = 'u32[]', space=smem, size = 0x4, offset = 0x4, fixed_abs, tag = 'smem constant byte address 0x4 - core index']
  #allocation1 [shape = 'u32[144,128]{1,0:T(1,128)}', space=vmem, size = 0x12000, scoped, tag = 'internal scratch']
  %s0 = inlined_call_operand.vmem [shape: bf16[128,32], index: 0, kind: input, shape index: {}]
  %s1 = inlined_call_operand.vmem [shape: bf16[32,136], index: 1, kind: input, shape index: {}]
  %s2 = inlined_call_operand.hbm [shape: bf16[128,128], index: 2, kind: output, shape index: {0}]
  %s3 = inlined_call_operand.vmem [shape: f32[128,8], index: 3, kind: output, shape index: {1}]
  %4 = xla_tuple %s2, %s3
  %s5 = sld [smem:[#allocation0]]
  $region26: #{tpu_custom_call.1} parent=0
    _
  %s7 = ssub.s32 1, %s5
  %s8 = scalar_select 0, %s7, %s5
  $region1: #{tpu_custom_call.1} parent=0
    #allocation2 [shape = 'u8[32768]{0}', space=vmem, size = 0x8000, scoped, tag = 'output window, operand 0, single buffered']
    #allocation3 [shape = 's32[1]{0}', space=sflag, size = 0x4, scoped, tag = 'scoped memory for tpu_custom_call.1']
    %9 = vsyncpa [#allocation3], 0
    // Predicated region
    $region2: #{tpu_custom_call.1} parent=1 // pred_check
      _
    $region3: #{tpu_custom_call.1} parent=1 // pred_check_branch
      %11 = sbr.rel (0) target = $region5
    $region4: #{tpu_custom_call.1} parent=1 // pred_region
      _
    $region5: #{tpu_custom_call.1} parent=1 // pred_fallthru
      _
    // Predicated region
    $region6: #{tpu_custom_call.1} parent=1 // pred_check
      _
    $region7: #{tpu_custom_call.1} parent=1 // pred_check_branch
      %13 = sbr.rel (0) target = $region9
    $region8: #{tpu_custom_call.1} parent=1 // pred_region
      _
    $region9: #{tpu_custom_call.1} parent=1 // pred_fallthru
      _
    %v15 = vld [vmem:[%s0] sm:$0xf]
    %v16 = vld [vmem:[%s0 + $0x4] sm:$0xf]
    %v17 = vld [vmem:[%s0 + $0x8] sm:$0xf]
    %v18 = vld [vmem:[%s0 + $0xc] sm:$0xf]
    %v19 = vld [vmem:[%s0 + $0x10] sm:$0xf]
    %v20 = vld [vmem:[%s0 + $0x14] sm:$0xf]
    %v21 = vld [vmem:[%s0 + $0x18] sm:$0xf]
    %v22 = vld [vmem:[%s0 + $0x1c] sm:$0xf]
    %v23 = vld [vmem:[%s0 + $0x20] sm:$0xf]
    %v24 = vld [vmem:[%s0 + $0x24] sm:$0xf]
    %v25 = vld [vmem:[%s0 + $0x28] sm:$0xf]
    %v26 = vld [vmem:[%s0 + $0x2c] sm:$0xf]
    %v27 = vld [vmem:[%s0 + $0x30] sm:$0xf]
    %v28 = vld [vmem:[%s0 + $0x34] sm:$0xf]
    %v29 = vld [vmem:[%s0 + $0x38] sm:$0xf]
    %v30 = vld [vmem:[%s0 + $0x3c] sm:$0xf]
    %v31 = vld [vmem:[%s1] sm:$0xff]
    %v32 = vld [vmem:[%s1 + $0x8] sm:$0xff]
    %v33 = vld [vmem:[%s1 + $0x10] sm:$0xff]
    %v34 = vld [vmem:[%s1 + $0x18] sm:$0xff]
    %v51 = vunpack.c.l.b16 %v15
    %v52 = vunpack.c.l.b16 %v16
    %v53 = vunpack.c.l.b16 %v17
    %v54 = vunpack.c.l.b16 %v18
    %v55 = vunpack.c.l.b16 %v19
    %v56 = vunpack.c.l.b16 %v20
    %v57 = vunpack.c.l.b16 %v21
    %v58 = vunpack.c.l.b16 %v22
    %v59 = vunpack.c.l.b16 %v23
    %v60 = vunpack.c.l.b16 %v24
    %v61 = vunpack.c.l.b16 %v25
    %v62 = vunpack.c.l.b16 %v26
    %v63 = vunpack.c.l.b16 %v27
    %v64 = vunpack.c.l.b16 %v28
    %v65 = vunpack.c.l.b16 %v29
    %v66 = vunpack.c.l.b16 %v30
    %v67 = vpack.c.b16 %v52, %v51
    %v68 = vpack.c.b16 %v54, %v53
    %v69 = vpack.c.b16 %v56, %v55
    %v70 = vpack.c.b16 %v58, %v57
    %v71 = vpack.c.b16 %v60, %v59
    %v72 = vpack.c.b16 %v62, %v61
    %v73 = vpack.c.b16 %v64, %v63
    %v74 = vpack.c.b16 %v66, %v65
    %v79 = vunpack.c.l.b16 %v31
    %v80 = vunpack.c.h.b16 %v31
    %v81 = vunpack.c.l.b16 %v32
    %v82 = vunpack.c.h.b16 %v32
    %v83 = vunpack.c.l.b16 %v33
    %v84 = vunpack.c.h.b16 %v33
    %v85 = vunpack.c.l.b16 %v34
    %v86 = vunpack.c.h.b16 %v34
    %v87 = vpack.c.b16 %v81, %v79
    %v88 = vpack.c.b16 %v82, %v80
    %v89 = vpack.c.b16 %v85, %v83
    %v90 = vpack.c.b16 %v86, %v84
    %vm95 = vcmask 261120
    %v97 = vsel %vm95, %v67, 0
    %v100 = vsel %vm95, %v68, 0
    %v103 = vsel %vm95, %v69, 0
    %v106 = vsel %vm95, %v70, 0
    %v109 = vsel %vm95, %v71, 0
    %v112 = vsel %vm95, %v72, 0
    %v115 = vsel %vm95, %v73, 0
    %v118 = vsel %vm95, %v74, 0
    %120 = vmatprep.subr.bf16.mxu0 %v88
    %121 = vmatpush1.bf16.msra.mxu0 %v87
    %122 = vmatprep.subr.bf16.mxu0 %v90
    %123 = vmatpush1.bf16.msra.mxu0 %v89
    %124 = vmatprep.subr.bf16.mxu0 0
    %125 = vmatpush1.bf16.msra.mxu0 0
    %126 = vmatprep.subr.bf16.mxu0 0
    %127 = vmatpush1.bf16.msra.mxu0 0
    %128 = vmatprep.subr.bf16.mxu0 0
    %129 = vmatpush1.bf16.msra.mxu0 0
    %130 = vmatprep.subr.bf16.mxu0 0
    %131 = vmatpush1.bf16.msra.mxu0 0
    %132 = vmatprep.subr.bf16.mxu0 0
    %133 = vmatpush1.bf16.msra.mxu0 0
    %134 = vmatprep.subr.bf16.mxu0 0
    %135 = vmatpush1.bf16.msra.mxu0 0
    %136 = vmatprep.subr.bf16.mxu0 0
    %137 = vmatpush1.bf16.msra.mxu0 0
    %138 = vmatprep.subr.bf16.mxu0 0
    %139 = vmatpush1.bf16.msra.mxu0 0
    %140 = vmatprep.subr.bf16.mxu0 0
    %141 = vmatpush1.bf16.msra.mxu0 0
    %142 = vmatprep.subr.bf16.mxu0 0
    %143 = vmatpush1.bf16.msra.mxu0 0
    %144 = vmatprep.subr.bf16.mxu0 0
    %145 = vmatpush1.bf16.msra.mxu0 0
    %146 = vmatprep.subr.bf16.mxu0 0
    %147 = vmatpush1.bf16.msra.mxu0 0
    %148 = vmatprep.subr.bf16.mxu0 0
    %149 = vmatpush1.bf16.msra.mxu0 0
    %150 = vmatprep.subr.bf16.mxu0 0
    %151 = vmatpush1.bf16.msra.mxu0 0
    %152 = vmatprep.mubr.bf16.mxu0 0
    %153 = vmatmul.mubr.bf16.gmra.mrb[0].mxu0 %v97
    %v154 = vpop.f32.mrb[0].mxu0
    %v155 = vadd.f32 0.0, %v154
    %v156 = vpop.f32.mrb[0].mxu0
    %v157 = vadd.f32 0.0, %v156
    %v158 = vpop.f32.mrb[0].mxu0
    %v159 = vadd.f32 0.0, %v158
    %v160 = vpop.f32.mrb[0].mxu0
    %v161 = vadd.f32 0.0, %v160
    %162 = vmatprep.mubr.bf16.mxu0 0
    %163 = vmatmul.mubr.bf16.gmra.mrb[0].mxu0 %v100
    %v164 = vpop.f32.mrb[0].mxu0
    %v165 = vadd.f32 0.0, %v164
    %v166 = vpop.f32.mrb[0].mxu0
    %v167 = vadd.f32 0.0, %v166
    %v168 = vpop.f32.mrb[0].mxu0
    %v169 = vadd.f32 0.0, %v168
    %v170 = vpop.f32.mrb[0].mxu0
    %v171 = vadd.f32 0.0, %v170
    %172 = vmatprep.mubr.bf16.mxu0 0
    %173 = vmatmul.mubr.bf16.gmra.mrb[0].mxu0 %v103
    %v174 = vpop.f32.mrb[0].mxu0
    %v175 = vadd.f32 0.0, %v174
    %v176 = vpop.f32.mrb[0].mxu0
    %v177 = vadd.f32 0.0, %v176
    %v178 = vpop.f32.mrb[0].mxu0
    %v179 = vadd.f32 0.0, %v178
    %v180 = vpop.f32.mrb[0].mxu0
    %v181 = vadd.f32 0.0, %v180
    %182 = vmatprep.mubr.bf16.mxu0 0
    %183 = vmatmul.mubr.bf16.gmra.mrb[0].mxu0 %v106
    %v184 = vpop.f32.mrb[0].mxu0
    %v185 = vadd.f32 0.0, %v184
    %v186 = vpop.f32.mrb[0].mxu0
    %v187 = vadd.f32 0.0, %v186
    %v188 = vpop.f32.mrb[0].mxu0
    %v189 = vadd.f32 0.0, %v188
    %v190 = vpop.f32.mrb[0].mxu0
    %v191 = vadd.f32 0.0, %v190
    %192 = vmatprep.mubr.bf16.mxu0 0
    %193 = vmatmul.mubr.bf16.gmra.mrb[0].mxu0 %v109
    %v194 = vpop.f32.mrb[0].mxu0
    %v195 = vadd.f32 0.0, %v194
    %v196 = vpop.f32.mrb[0].mxu0
    %v197 = vadd.f32 0.0, %v196
    %v198 = vpop.f32.mrb[0].mxu0
    %v199 = vadd.f32 0.0, %v198
    %v200 = vpop.f32.mrb[0].mxu0
    %v201 = vadd.f32 0.0, %v200
    %202 = vmatprep.mubr.bf16.mxu0 0
    %203 = vmatmul.mubr.bf16.gmra.mrb[0].mxu0 %v112
    %v204 = vpop.f32.mrb[0].mxu0
    %v205 = vadd.f32 0.0, %v204
    %v206 = vpop.f32.mrb[0].mxu0
    %v207 = vadd.f32 0.0, %v206
    %v208 = vpop.f32.mrb[0].mxu0
    %v209 = vadd.f32 0.0, %v208
    %v210 = vpop.f32.mrb[0].mxu0
    %v211 = vadd.f32 0.0, %v210
    %212 = vmatprep.mubr.bf16.mxu0 0
    %213 = vmatmul.mubr.bf16.gmra.mrb[0].mxu0 %v115
    %v214 = vpop.f32.mrb[0].mxu0
    %v215 = vadd.f32 0.0, %v214
    %v216 = vpop.f32.mrb[0].mxu0
    %v217 = vadd.f32 0.0, %v216
    %v218 = vpop.f32.mrb[0].mxu0
    %v219 = vadd.f32 0.0, %v218
    %v220 = vpop.f32.mrb[0].mxu0
    %v221 = vadd.f32 0.0, %v220
    %222 = vmatprep.mubr.bf16.mxu0 0
    %223 = vmatmul.mubr.bf16.gmra.mrb[0].mxu0 %v118
    %v224 = vpop.f32.mrb[0].mxu0
    %v225 = vadd.f32 0.0, %v224
    %v226 = vpop.f32.mrb[0].mxu0
    %v227 = vadd.f32 0.0, %v226
    %v228 = vpop.f32.mrb[0].mxu0
    %v229 = vadd.f32 0.0, %v228
    %v230 = vpop.f32.mrb[0].mxu0
    %v231 = vadd.f32 0.0, %v230
    %232 = vdwg.mxu0
    %vm233 = vcmp.ne.f32.partialorder %v155, %v155
    %vm234 = vcmp.ne.f32.partialorder %v157, %v157
    %vm235 = vcmp.ne.f32.partialorder %v159, %v159
    %vm236 = vcmp.ne.f32.partialorder %v161, %v161
    %vm237 = vcmp.ne.f32.partialorder %v165, %v165
    %vm238 = vcmp.ne.f32.partialorder %v167, %v167
    %vm239 = vcmp.ne.f32.partialorder %v169, %v169
    %vm240 = vcmp.ne.f32.partialorder %v171, %v171
    %vm241 = vcmp.ne.f32.partialorder %v175, %v175
    %vm242 = vcmp.ne.f32.partialorder %v177, %v177
    %vm243 = vcmp.ne.f32.partialorder %v179, %v179
    %vm244 = vcmp.ne.f32.partialorder %v181, %v181
    %vm245 = vcmp.ne.f32.partialorder %v185, %v185
    %vm246 = vcmp.ne.f32.partialorder %v187, %v187
    %vm247 = vcmp.ne.f32.partialorder %v189, %v189
    %vm248 = vcmp.ne.f32.partialorder %v191, %v191
    %vm249 = vcmp.ne.f32.partialorder %v195, %v195
    %vm250 = vcmp.ne.f32.partialorder %v197, %v197
    %vm251 = vcmp.ne.f32.partialorder %v199, %v199
    %vm252 = vcmp.ne.f32.partialorder %v201, %v201
    %vm253 = vcmp.ne.f32.partialorder %v205, %v205
    %vm254 = vcmp.ne.f32.partialorder %v207, %v207
    %vm255 = vcmp.ne.f32.partialorder %v209, %v209
    %vm256 = vcmp.ne.f32.partialorder %v211, %v211
    %vm257 = vcmp.ne.f32.partialorder %v215, %v215
    %vm258 = vcmp.ne.f32.partialorder %v217, %v217
    %vm259 = vcmp.ne.f32.partialorder %v219, %v219
    %vm260 = vcmp.ne.f32.partialorder %v221, %v221
    %vm261 = vcmp.ne.f32.partialorder %v225, %v225
    %vm262 = vcmp.ne.f32.partialorder %v227, %v227
    %vm263 = vcmp.ne.f32.partialorder %v229, %v229
    %vm264 = vcmp.ne.f32.partialorder %v231, %v231
    %v265 = vsel %vm233, 0.0, %v155
    %v266 = vsel %vm234, 0.0, %v157
    %v267 = vsel %vm235, 0.0, %v159
    %v268 = vsel %vm236, 0.0, %v161
    %v269 = vsel %vm237, 0.0, %v165
    %v270 = vsel %vm238, 0.0, %v167
    %v271 = vsel %vm239, 0.0, %v169
    %v272 = vsel %vm240, 0.0, %v171
    %v273 = vsel %vm241, 0.0, %v175
    %v274 = vsel %vm242, 0.0, %v177
    %v275 = vsel %vm243, 0.0, %v179
    %v276 = vsel %vm244, 0.0, %v181
    %v277 = vsel %vm245, 0.0, %v185
    %v278 = vsel %vm246, 0.0, %v187
    %v279 = vsel %vm247, 0.0, %v189
    %v280 = vsel %vm248, 0.0, %v191
    %v281 = vsel %vm249, 0.0, %v195
    %v282 = vsel %vm250, 0.0, %v197
    %v283 = vsel %vm251, 0.0, %v199
    %v284 = vsel %vm252, 0.0, %v201
    %v285 = vsel %vm253, 0.0, %v205
    %v286 = vsel %vm254, 0.0, %v207
    %v287 = vsel %vm255, 0.0, %v209
    %v288 = vsel %vm256, 0.0, %v211
    %v289 = vsel %vm257, 0.0, %v215
    %v290 = vsel %vm258, 0.0, %v217
    %v291 = vsel %vm259, 0.0, %v219
    %v292 = vsel %vm260, 0.0, %v221
    %v293 = vsel %vm261, 0.0, %v225
    %v294 = vsel %vm262, 0.0, %v227
    %v295 = vsel %vm263, 0.0, %v229
    %v296 = vsel %vm264, 0.0, %v231
    %v297 = vpack.c.bf16 %v267, %v265
    %v298 = vpack.c.bf16 %v271, %v269
    %v299 = vpack.c.bf16 %v275, %v273
    %v300 = vpack.c.bf16 %v279, %v277
    %v301 = vpack.c.bf16 %v283, %v281
    %v302 = vpack.c.bf16 %v287, %v285
    %v303 = vpack.c.bf16 %v291, %v289
    %v304 = vpack.c.bf16 %v295, %v293
    %v313 = vunpack.c.l.b16 %v297
    %v314 = vunpack.c.h.b16 %v297
    %v315 = vunpack.c.l.b16 %v298
    %v316 = vunpack.c.h.b16 %v298
    %v317 = vunpack.c.l.b16 %v299
    %v318 = vunpack.c.h.b16 %v299
    %v319 = vunpack.c.l.b16 %v300
    %v320 = vunpack.c.h.b16 %v300
    %v321 = vunpack.c.l.b16 %v301
    %v322 = vunpack.c.h.b16 %v301
    %v323 = vunpack.c.l.b16 %v302
    %v324 = vunpack.c.h.b16 %v302
    %v325 = vunpack.c.l.b16 %v303
    %v326 = vunpack.c.h.b16 %v303
    %v327 = vunpack.c.l.b16 %v304
    %v328 = vunpack.c.h.b16 %v304
    %v329 = vpack.c.b16 %v313, %v313
    %v330 = vpack.c.b16 %v314, %v314
    %v331 = vpack.c.b16 %v315, %v315
    %v332 = vpack.c.b16 %v316, %v316
    %v333 = vpack.c.b16 %v317, %v317
    %v334 = vpack.c.b16 %v318, %v318
    %v335 = vpack.c.b16 %v319, %v319
    %v336 = vpack.c.b16 %v320, %v320
    %v337 = vpack.c.b16 %v321, %v321
    %v338 = vpack.c.b16 %v322, %v322
    %v339 = vpack.c.b16 %v323, %v323
    %v340 = vpack.c.b16 %v324, %v324
    %v341 = vpack.c.b16 %v325, %v325
    %v342 = vpack.c.b16 %v326, %v326
    %v343 = vpack.c.b16 %v327, %v327
    %v344 = vpack.c.b16 %v328, %v328
    %361 = vst [vmem:[#allocation2] sm:$0xf] %v329
    %362 = vst [vmem:[#allocation2 + $0x4] sm:$0xf] %v330
    %363 = vst [vmem:[#allocation2 + $0x8] sm:$0xf] %v331
    %364 = vst [vmem:[#allocation2 + $0xc] sm:$0xf] %v332
    %365 = vst [vmem:[#allocation2 + $0x10] sm:$0xf] %v333
    %366 = vst [vmem:[#allocation2 + $0x14] sm:$0xf] %v334
    %367 = vst [vmem:[#allocation2 + $0x18] sm:$0xf] %v335
    %368 = vst [vmem:[#allocation2 + $0x1c] sm:$0xf] %v336
    %369 = vst [vmem:[#allocation2 + $0x20] sm:$0xf] %v337
    %370 = vst [vmem:[#allocation2 + $0x24] sm:$0xf] %v338
    %371 = vst [vmem:[#allocation2 + $0x28] sm:$0xf] %v339
    %372 = vst [vmem:[#allocation2 + $0x2c] sm:$0xf] %v340
    %373 = vst [vmem:[#allocation2 + $0x30] sm:$0xf] %v341
    %374 = vst [vmem:[#allocation2 + $0x34] sm:$0xf] %v342
    %375 = vst [vmem:[#allocation2 + $0x38] sm:$0xf] %v343
    %376 = vst [vmem:[#allocation2 + $0x3c] sm:$0xf] %v344
    %vm377 = vcmask 64512
    %378 = vst.msk [vmem:[%s3] sm:$0xff] %vm377, %v266
    %379 = vst.msk [vmem:[%s3 + $0x8] sm:$0xff] %vm377, %v268
    %380 = vst.msk [vmem:[%s3 + $0x10] sm:$0xff] %vm377, %v270
    %381 = vst.msk [vmem:[%s3 + $0x18] sm:$0xff] %vm377, %v272
    %382 = vst.msk [vmem:[%s3 + $0x20] sm:$0xff] %vm377, %v274
    %383 = vst.msk [vmem:[%s3 + $0x28] sm:$0xff] %vm377, %v276
    %384 = vst.msk [vmem:[%s3 + $0x30] sm:$0xff] %vm377, %v278
    %385 = vst.msk [vmem:[%s3 + $0x38] sm:$0xff] %vm377, %v280
    %386 = vst.msk [vmem:[%s3 + $0x40] sm:$0xff] %vm377, %v282
    %387 = vst.msk [vmem:[%s3 + $0x48] sm:$0xff] %vm377, %v284
    %388 = vst.msk [vmem:[%s3 + $0x50] sm:$0xff] %vm377, %v286
    %389 = vst.msk [vmem:[%s3 + $0x58] sm:$0xff] %vm377, %v288
    %390 = vst.msk [vmem:[%s3 + $0x60] sm:$0xff] %vm377, %v290
    %391 = vst.msk [vmem:[%s3 + $0x68] sm:$0xff] %vm377, %v292
    %392 = vst.msk [vmem:[%s3 + $0x70] sm:$0xff] %vm377, %v294
    %393 = vst.msk [vmem:[%s3 + $0x78] sm:$0xff] %vm377, %v296
    // Predicated region
    $region10: #{tpu_custom_call.1} parent=1 // pred_check
      _
    $region11: #{tpu_custom_call.1} parent=1 // pred_check_branch
      %395 = sbr.rel (0) target = $region13
    $region12: #{tpu_custom_call.1} parent=1 // pred_region
      %s397 = ssub.s32 1024, 1024
      %398 = vsyncadd [#allocation3], %s397
      %s399 = sshll.u32 [#allocation2], 4
      %s400 = int_to_ptr.vmem [resolvable:$true] %s399
      %405 = dma.vmem_to_hbm [thread:$0]  %s400, 1024, %s2, [#allocation3], 64, 64, 4
    $region13: #{tpu_custom_call.1} parent=1 // pred_fallthru
      _
    // Predicated region
    $region14: #{tpu_custom_call.1} parent=1 // pred_check
      _
    $region15: #{tpu_custom_call.1} parent=1 // pred_check_branch
      %407 = sbr.rel (0) target = $region17
    $region16: #{tpu_custom_call.1} parent=1 // pred_region
      _
    $region17: #{tpu_custom_call.1} parent=1 // pred_fallthru
      _
    // Predicated region
    $region18: #{tpu_custom_call.1} parent=1 // pred_check
      _
    $region19: #{tpu_custom_call.1} parent=1 // pred_check_branch
      %409 = sbr.rel (0) target = $region21
    $region20: #{tpu_custom_call.1} parent=1 // pred_region
      %410 = dma.done [#allocation3], 1024
    $region21: #{tpu_custom_call.1} parent=1 // pred_fallthru
      _
    // Predicated region
    $region22: #{tpu_custom_call.1} parent=1 // pred_check
      _
    $region23: #{tpu_custom_call.1} parent=1 // pred_check_branch
      %412 = sbr.rel (0) target = $region25
    $region24: #{tpu_custom_call.1} parent=1 // pred_region
      _
    $region25: #{tpu_custom_call.1} parent=1 // pred_fallthru
      _
    %413 = vsyncpa [#allocation3], 1

</llo_original>
